<compile_context>
chip_gen: v7x
topology: tpu7x:2x2x1
jax: 0.10.0
libtpu: 0.0.40
codegen_flags: <defaults>
</compile_context>

<pallas_src>
import functools
import math

import jax
import jax.numpy as jnp
from jax import lax
from jax.experimental import pallas as pl
from jax.experimental.pallas import tpu as pltpu


def _bilinear_matrix(in_size: int, scale: float) -> jnp.ndarray:
    """(out_size, in_size) interpolation matrix matching PyTorch bilinear,
    align_corners=False, with an explicit scale_factor (ratio = 1/scale)."""
    out_size = int(in_size * scale)
    out_idx = jnp.arange(out_size, dtype=jnp.float32)
    src = (out_idx + 0.5) * (1.0 / scale) - 0.5
    src = jnp.maximum(src, 0.0)                                   # clamp negatives to 0
    idx0 = jnp.minimum(jnp.floor(src).astype(jnp.int32), in_size - 1)
    idx1 = jnp.minimum(idx0 + 1, in_size - 1)
    w1 = src - idx0.astype(jnp.float32)
    w0 = 1.0 - w1
    oh0 = jax.nn.one_hot(idx0, in_size, dtype=jnp.float32)
    oh1 = jax.nn.one_hot(idx1, in_size, dtype=jnp.float32)
    # when idx0 == idx1 (border), the two weights land on the same column and sum to 1
    return w0[:, None] * oh0 + w1[:, None] * oh1


def _interp_kernel(ah_ref, awbd_ref, x_ref, o_ref, *, n_chunks, unroll, compute_dtype):
    # ah_ref:   (H_out, H)                 -- resident across the grid
    # awbd_ref: (CW_in, CW_out)            -- block-diagonal A_w^T, resident
    # x_ref:    (n_chunks, H, CW_in)       -- CW_in  = TB_LANE * W      (multiple of 128)
    # o_ref:    (n_chunks, H_out, CW_out)  -- CW_out = TB_LANE * W_out
    ah = ah_ref[...]
    awbd = awbd_ref[...]

    def chunk(c, carry):
        xc = x_ref[c].astype(compute_dtype)                               # (H, CW_in)
        t = jnp.dot(ah, xc, preferred_element_type=jnp.float32)           # (H_out, CW_in)
        y = jnp.dot(t.astype(compute_dtype), awbd,
                    preferred_element_type=jnp.float32)                   # (H_out, CW_out)
        o_ref[c] = y.astype(o_ref.dtype)
        return carry

    lax.fori_loop(0, n_chunks, chunk, 0, unroll=unroll)


def interpolate_bilinear(x: jnp.ndarray, scale: float) -> jnp.ndarray:
    """Equivalent of Interpolate(scale)(x) with x in NCHW."""
    N, C, H, W = x.shape
    H_out = int(H * scale)
    W_out = int(W * scale)
    NC = N * C
    itemsize = jnp.dtype(x.dtype).itemsize

    # bf16 stays bf16 into the MXU (f32 accumulate); everything else computes in f32.
    compute_dtype = jnp.bfloat16 if x.dtype == jnp.bfloat16 else jnp.float32

    # ---- lane packing: TB_LANE slabs side by side so packed width is a multiple of 128.
    tb_lane = 128 // math.gcd(W, 128)
    if tb_lane * W > 1024:                 # awkward W: keep the block-diagonal weight small
        tb_lane = max(1, -(-128 // W))
    cw_in = tb_lane * W
    cw_out = tb_lane * W_out

    total_chunks = pl.cdiv(NC, tb_lane)

    chunk_in_bytes = cw_in * H * itemsize
    chunk_out_bytes = cw_out * H_out * itemsize
    # chunks per grid step: target >= ~512 KB of input per DMA, bounded so in+out blocks
    # stay <= ~10 MiB (double-buffered this fits comfortably under v7x's 64 MiB VMEM).
    target_chunks = max(1, (512 * 1024) // chunk_in_bytes)
    vmem_chunks = max(1, (10 * 1024 * 1024) // (chunk_in_bytes + chunk_out_bytes))
    n_chunks = max(1, min(target_chunks, vmem_chunks, total_chunks))
    if total_chunks > 1:
        # keep at least 2 grid steps so v7x's two TensorCores both get work
        n_chunks = min(n_chunks, pl.cdiv(total_chunks, 2))
    grid_len = pl.cdiv(total_chunks, n_chunks)
    n_total = grid_len * n_chunks
    nc_pad = n_total * tb_lane

    # ---- weights: A_h plain, A_w pre-transposed + block-diagonalized (built once, host side).
    a_h = _bilinear_matrix(H, scale).astype(compute_dtype)                 # (H_out, H)
    a_w_t = _bilinear_matrix(W, scale).T                                   # (W, W_out)
    eye = jnp.eye(tb_lane, dtype=jnp.float32)
    a_w_bd = (jnp.einsum("bc,wp->bwcp", eye, a_w_t)
              .reshape(cw_in, cw_out)
              .astype(compute_dtype))                                      # (CW_in, CW_out)

    # ---- layout plumbing (wrapper-side; lane-dense blocks for the kernel).
    x_flat = x.reshape(NC, H, W)
    if nc_pad != NC:
        x_flat = jnp.pad(x_flat, ((0, nc_pad - NC), (0, 0), (0, 0)))
    x_blk = (x_flat.reshape(n_total, tb_lane, H, W)
             .transpose(0, 2, 1, 3)
             .reshape(n_total, H, cw_in))

    kernel = functools.partial(
        _interp_kernel,
        n_chunks=n_chunks,
        unroll=min(n_chunks, 8),
        compute_dtype=compute_dtype,
    )

    # advisory cost estimate so XLA can overlap this (mem-bound) call with neighbors
    flops = 2 * n_total * H_out * cw_in * (H + cw_out)
    bytes_accessed = int((x_blk.size + n_total * H_out * cw_out) * itemsize
                         + a_h.size * a_h.dtype.itemsize
                         + a_w_bd.size * a_w_bd.dtype.itemsize)

    block_bytes = n_chunks * (chunk_in_bytes + chunk_out_bytes)
    weight_bytes = int((a_h.size + a_w_bd.size) * jnp.dtype(compute_dtype).itemsize)
    vmem_limit = int(min(max(2 * block_bytes + 2 * weight_bytes + (4 << 20), 32 << 20),
                         56 << 20))

    out_blk = pl.pallas_call(
        kernel,
        out_shape=jax.ShapeDtypeStruct((n_total, H_out, cw_out), x.dtype),
        grid_spec=pltpu.PrefetchScalarGridSpec(
            num_scalar_prefetch=0,
            grid=(grid_len,),
            in_specs=[
                pl.BlockSpec((H_out, H), lambda i: (0, 0)),              # A_h (resident)
                pl.BlockSpec((cw_in, cw_out), lambda i: (0, 0)),         # block-diag A_w^T
                pl.BlockSpec((n_chunks, H, cw_in), lambda i: (i, 0, 0)),
            ],
            out_specs=pl.BlockSpec((n_chunks, H_out, cw_out), lambda i: (i, 0, 0)),
        ),
        compiler_params=pltpu.CompilerParams(
            dimension_semantics=("parallel",),
            vmem_limit_bytes=vmem_limit,
        ),
        cost_estimate=pl.CostEstimate(
            flops=flops, transcendentals=0, bytes_accessed=bytes_accessed),
    )(a_h, a_w_bd, x_blk)

    out = (out_blk.reshape(n_total, H_out, tb_lane, W_out)
           .transpose(0, 2, 1, 3)
           .reshape(nc_pad, H_out, W_out)[:NC]
           .reshape(N, C, H_out, W_out))
    return out


if __name__ == "__main__":
    scale = 2.0

    # primary shape implied by the module spec
    x = jax.random.normal(jax.random.PRNGKey(0), (2, 4, 16, 16), dtype=jnp.float32)
    y = interpolate_bilinear(x, scale)
    jax.block_until_ready(y)
    y_ref = jnp.einsum("oh,nchw,pw->ncop",
                       _bilinear_matrix(16, scale), x, _bilinear_matrix(16, scale))
    assert y.shape == (2, 4, 32, 32)
    assert jnp.allclose(y, y_ref, atol=2e-4, rtol=2e-4)

    # second case: exercises NC padding and non-square spatial dims
    x2 = jax.random.normal(jax.random.PRNGKey(0), (1, 3, 8, 24), dtype=jnp.float32)
    y2 = interpolate_bilinear(x2, scale)
    jax.block_until_ready(y2)
    y2_ref = jnp.einsum("oh,nchw,pw->ncop",
                        _bilinear_matrix(8, scale), x2, _bilinear_matrix(24, scale))
    assert y2.shape == (1, 3, 16, 48)
    assert jnp.allclose(y2, y2_ref, atol=2e-4, rtol=2e-4)

    print("KERNEL_OK")
</pallas_src>

<mosaic_0001>
module attributes {stable_mosaic.version = 11 : i64} {
  func.func @_interp_kernel(%arg0: i32, %arg1: memref<32x16xf32, #tpu.memory_space<vmem>>, %arg2: memref<128x256xf32, #tpu.memory_space<vmem>>, %arg3: memref<1x16x128xf32, #tpu.memory_space<vmem>>, %arg4: memref<1x32x256xf32, #tpu.memory_space<vmem>>) attributes {dimension_semantics = [#tpu.dimension_semantics<parallel>], iteration_bounds = array<i64: 1>, scalar_prefetch = 0 : i64, scratch_operands = 0 : i64, tpu.core_type = #tpu.core_type<tc>, window_params = [{pipeline_mode = #tpu.pipeline_mode<synchronous>, transform_indices = @transform_0, window_bounds = array<i64: 32, 16>}, {pipeline_mode = #tpu.pipeline_mode<synchronous>, transform_indices = @transform_1, window_bounds = array<i64: 128, 256>}, {transform_indices = @transform_2, window_bounds = array<i64: 1, 16, 128>}, {transform_indices = @transform_3, window_bounds = array<i64: 1, 32, 256>}]} {
    %c0 = arith.constant 0 : index
    %c0_0 = arith.constant 0 : index
    %0 = vector.load %arg1[%c0, %c0_0] : memref<32x16xf32, #tpu.memory_space<vmem>>, vector<32x16xf32>
    %c0_1 = arith.constant 0 : index
    %c0_2 = arith.constant 0 : index
    %1 = vector.load %arg2[%c0_1, %c0_2] : memref<128x256xf32, #tpu.memory_space<vmem>>, vector<128x256xf32>
    %c0_i32 = arith.constant 0 : i32
    %2 = arith.index_cast %c0_i32 : i32 to index
    %c0_3 = arith.constant 0 : index
    %c0_4 = arith.constant 0 : index
    %3 = vector.load %arg3[%2, %c0_3, %c0_4] : memref<1x16x128xf32, #tpu.memory_space<vmem>>, vector<1x16x128xf32>
    %4 = vector.shape_cast %3 : vector<1x16x128xf32> to vector<16x128xf32>
    %cst = arith.constant dense<0.000000e+00> : vector<32x128xf32>
    %5 = tpu.matmul %0, %4, %cst {dimension_numbers = #tpu.dot_dimension_numbers<[1], [0], [0], [1], [0, 0, 1, 1], [], []>} : vector<32x16xf32>, vector<16x128xf32>, vector<32x128xf32> -> vector<32x128xf32>
    %cst_5 = arith.constant dense<0.000000e+00> : vector<32x256xf32>
    %6 = tpu.matmul %5, %1, %cst_5 {dimension_numbers = #tpu.dot_dimension_numbers<[1], [0], [0], [1], [0, 0, 1, 1], [], []>} : vector<32x128xf32>, vector<128x256xf32>, vector<32x256xf32> -> vector<32x256xf32>
    %7 = arith.index_cast %c0_i32 : i32 to index
    %c0_6 = arith.constant 0 : index
    %c0_7 = arith.constant 0 : index
    %8 = vector.load %arg4[%7, %c0_6, %c0_7] : memref<1x32x256xf32, #tpu.memory_space<vmem>>, vector<1x32x256xf32>
    %9 = vector.shape_cast %8 : vector<1x32x256xf32> to vector<32x256xf32>
    %10 = vector.shape_cast %6 : vector<32x256xf32> to vector<1x32x256xf32>
    tpu.vector_store %arg4[%7, %c0_6, %c0_7], %10 {strides = array<i32>} : memref<1x32x256xf32, #tpu.memory_space<vmem>>, vector<1x32x256xf32>,
    %c1_i32 = arith.constant 1 : i32
    return
  }
  func.func @transform_0(%arg0: i32) -> (i32, i32) {
    %c0_i32 = arith.constant 0 : i32
    %c0_i32_0 = arith.constant 0 : i32
    %c0_i32_1 = arith.constant 0 : i32
    return %c0_i32, %c0_i32_0 : i32, i32
  }
  func.func @transform_1(%arg0: i32) -> (i32, i32) {
    %c0_i32 = arith.constant 0 : i32
    %c0_i32_0 = arith.constant 0 : i32
    %c0_i32_1 = arith.constant 0 : i32
    return %c0_i32, %c0_i32_0 : i32, i32
  }
  func.func @transform_2(%arg0: i32) -> (i32, i32, i32) {
    %c0_i32 = arith.constant 0 : i32
    %c0_i32_0 = arith.constant 0 : i32
    %c0_i32_1 = arith.constant 0 : i32
    return %arg0, %c0_i32, %c0_i32_0 : i32, i32, i32
  }
  func.func @transform_3(%arg0: i32) -> (i32, i32, i32) {
    %c0_i32 = arith.constant 0 : i32
    %c0_i32_0 = arith.constant 0 : i32
    %c0_i32_1 = arith.constant 0 : i32
    return %arg0, %c0_i32, %c0_i32_0 : i32, i32, i32
  }
}

</mosaic_0001>

<llo_original>
// kernel: tpu_custom_call.1
$region0: #{tpu_custom_call.1}
  #allocation0 [shape = 'u32[]', space=smem, size = 0x4, offset = 0x4, fixed_abs, tag = 'smem constant byte address 0x4 - core index']
  #allocation1 [shape = 'u32[144,128]{1,0:T(1,128)}', space=vmem, size = 0x12000, scoped, tag = 'internal scratch']
  %s0 = inlined_call_operand.vmem [shape: f32[32,16], index: 0, kind: input, shape index: {}]
  %s1 = inlined_call_operand.hbm [shape: f32[128,256], index: 1, kind: input, shape index: {}]
  %s2 = inlined_call_operand.vmem [shape: f32[1,16,128], index: 2, kind: input, shape index: {}]
  %s3 = inlined_call_operand.hbm [shape: f32[1,32,256], index: 3, kind: output, shape index: {}]
  %s4 = sld [smem:[#allocation0]]
  $region26: #{tpu_custom_call.1} parent=0
    _
  %s6 = ssub.s32 1, %s4
  %s7 = scalar_select 0, %s6, %s4
  $region1: #{tpu_custom_call.1} parent=0
    #allocation2 [shape = 'u8[131072]{0}', space=vmem, size = 0x20000, scoped, tag = 'input window, operand 1, single buffered']
    #allocation3 [shape = 's32[1]{0}', space=sflag, size = 0x4, scoped, tag = 'scoped memory for tpu_custom_call.1']
    #allocation4 [shape = 's32[1]{0}', space=sflag, size = 0x4, scoped, tag = 'scoped memory for tpu_custom_call.1']
    #allocation5 [shape = 'u8[32768]{0}', space=vmem, size = 0x8000, scoped, tag = 'output window, operand 0, single buffered']
    %8 = vsyncpa [#allocation3], 0
    %9 = vsyncpa [#allocation4], 0
    // Predicated region
    $region2: #{tpu_custom_call.1} parent=1 // pred_check
      _
    $region3: #{tpu_custom_call.1} parent=1 // pred_check_branch
      %11 = sbr.rel (0) target = $region5
    $region4: #{tpu_custom_call.1} parent=1 // pred_region
      _
    $region5: #{tpu_custom_call.1} parent=1 // pred_fallthru
      _
    // Predicated region
    $region6: #{tpu_custom_call.1} parent=1 // pred_check
      _
    $region7: #{tpu_custom_call.1} parent=1 // pred_check_branch
      %13 = sbr.rel (0) target = $region9
    $region8: #{tpu_custom_call.1} parent=1 // pred_region
      %s15 = ssub.s32 4096, 4096
      %16 = vsyncadd [#allocation3], %s15
      %s17 = sshll.u32 [#allocation2], 4
      %s18 = int_to_ptr.vmem [resolvable:$true] %s17
      %23 = dma.hbm_to_vmem [thread:$0]  %s1, 4096, %s18, [#allocation3], 256, 256, 16
    $region9: #{tpu_custom_call.1} parent=1 // pred_fallthru
      _
    // Predicated region
    $region10: #{tpu_custom_call.1} parent=1 // pred_check
      _
    $region11: #{tpu_custom_call.1} parent=1 // pred_check_branch
      %25 = sbr.rel (0) target = $region13
    $region12: #{tpu_custom_call.1} parent=1 // pred_region
      _
    $region13: #{tpu_custom_call.1} parent=1 // pred_fallthru
      _
    // Predicated region
    $region14: #{tpu_custom_call.1} parent=1 // pred_check
      _
    $region15: #{tpu_custom_call.1} parent=1 // pred_check_branch
      %27 = sbr.rel (0) target = $region17
    $region16: #{tpu_custom_call.1} parent=1 // pred_region
      %28 = dma.done [#allocation3], 4096
    $region17: #{tpu_custom_call.1} parent=1 // pred_fallthru
      _
    %v29 = vld [vmem:[%s0] sm:$0xff]
    %v30 = vld [vmem:[%s0 + $0x8] sm:$0xff]
    %v31 = vld [vmem:[%s0 + $0x10] sm:$0xff]
    %v32 = vld [vmem:[%s0 + $0x18] sm:$0xff]
    %v33 = vld [vmem:[#allocation2] sm:$0xff]
    %v34 = vld [vmem:[#allocation2 + $0x8] sm:$0xff]
    %v35 = vld [vmem:[#allocation2 + $0x10] sm:$0xff]
    %v36 = vld [vmem:[#allocation2 + $0x18] sm:$0xff]
    %v37 = vld [vmem:[#allocation2 + $0x20] sm:$0xff]
    %v38 = vld [vmem:[#allocation2 + $0x28] sm:$0xff]
    %v39 = vld [vmem:[#allocation2 + $0x30] sm:$0xff]
    %v40 = vld [vmem:[#allocation2 + $0x38] sm:$0xff]
    %v41 = vld [vmem:[#allocation2 + $0x40] sm:$0xff]
    %v42 = vld [vmem:[#allocation2 + $0x48] sm:$0xff]
    %v43 = vld [vmem:[#allocation2 + $0x50] sm:$0xff]
    %v44 = vld [vmem:[#allocation2 + $0x58] sm:$0xff]
    %v45 = vld [vmem:[#allocation2 + $0x60] sm:$0xff]
    %v46 = vld [vmem:[#allocation2 + $0x68] sm:$0xff]
    %v47 = vld [vmem:[#allocation2 + $0x70] sm:$0xff]
    %v48 = vld [vmem:[#allocation2 + $0x78] sm:$0xff]
    %v49 = vld [vmem:[#allocation2 + $0x80] sm:$0xff]
    %v50 = vld [vmem:[#allocation2 + $0x88] sm:$0xff]
    %v51 = vld [vmem:[#allocation2 + $0x90] sm:$0xff]
    %v52 = vld [vmem:[#allocation2 + $0x98] sm:$0xff]
    %v53 = vld [vmem:[#allocation2 + $0xa0] sm:$0xff]
    %v54 = vld [vmem:[#allocation2 + $0xa8] sm:$0xff]
    %v55 = vld [vmem:[#allocation2 + $0xb0] sm:$0xff]
    %v56 = vld [vmem:[#allocation2 + $0xb8] sm:$0xff]
    %v57 = vld [vmem:[#allocation2 + $0xc0] sm:$0xff]
    %v58 = vld [vmem:[#allocation2 + $0xc8] sm:$0xff]
    %v59 = vld [vmem:[#allocation2 + $0xd0] sm:$0xff]
    %v60 = vld [vmem:[#allocation2 + $0xd8] sm:$0xff]
    %v61 = vld [vmem:[#allocation2 + $0xe0] sm:$0xff]
    %v62 = vld [vmem:[#allocation2 + $0xe8] sm:$0xff]
    %v63 = vld [vmem:[#allocation2 + $0xf0] sm:$0xff]
    %v64 = vld [vmem:[#allocation2 + $0xf8] sm:$0xff]
    %v65 = vld [vmem:[%s2] sm:$0xff]
    %v66 = vld [vmem:[%s2 + $0x8] sm:$0xff]
    %vm67 = vcmask 130048
    %v69 = vsel %vm67, %v29, 0
    %v72 = vsel %vm67, %v30, 0
    %v75 = vsel %vm67, %v31, 0
    %v78 = vsel %vm67, %v32, 0
    %80 = vmatprep.subr.mxu0 0.0
    %81 = vmatpush1.msra.mxu0 %v65
    %82 = vmatprep.subr.mxu0 0.0
    %83 = vmatpush1.msra.mxu0 %v66
    %84 = vmatprep.subr.mxu0 0.0
    %85 = vmatpush1.msra.mxu0 0.0
    %86 = vmatprep.subr.mxu0 0.0
    %87 = vmatpush1.msra.mxu0 0.0
    %88 = vmatprep.subr.mxu0 0.0
    %89 = vmatpush1.msra.mxu0 0.0
    %90 = vmatprep.subr.mxu0 0.0
    %91 = vmatpush1.msra.mxu0 0.0
    %92 = vmatprep.subr.mxu0 0.0
    %93 = vmatpush1.msra.mxu0 0.0
    %94 = vmatprep.subr.mxu0 0.0
    %95 = vmatpush1.msra.mxu0 0.0
    %96 = vmatprep.subr.mxu0 0.0
    %97 = vmatpush1.msra.mxu0 0.0
    %98 = vmatprep.subr.mxu0 0.0
    %99 = vmatpush1.msra.mxu0 0.0
    %100 = vmatprep.subr.mxu0 0.0
    %101 = vmatpush1.msra.mxu0 0.0
    %102 = vmatprep.subr.mxu0 0.0
    %103 = vmatpush1.msra.mxu0 0.0
    %104 = vmatprep.subr.mxu0 0.0
    %105 = vmatpush1.msra.mxu0 0.0
    %106 = vmatprep.subr.mxu0 0.0
    %107 = vmatpush1.msra.mxu0 0.0
    %108 = vmatprep.subr.mxu0 0.0
    %109 = vmatpush1.msra.mxu0 0.0
    %110 = vmatprep.subr.mxu0 0.0
    %111 = vmatpush1.msra.mxu0 0.0
    %112 = vmatprep.subr.mxu0 0.0
    %113 = vmatpush1.msra.mxu0 0.0
    %114 = vmatprep.subr.mxu0 0.0
    %115 = vmatpush1.msra.mxu0 0.0
    %116 = vmatprep.subr.mxu0 0.0
    %117 = vmatpush1.msra.mxu0 0.0
    %118 = vmatprep.subr.mxu0 0.0
    %119 = vmatpush1.msra.mxu0 0.0
    %120 = vmatprep.subr.mxu0 0.0
    %121 = vmatpush1.msra.mxu0 0.0
    %122 = vmatprep.subr.mxu0 0.0
    %123 = vmatpush1.msra.mxu0 0.0
    %124 = vmatprep.subr.mxu0 0.0
    %125 = vmatpush1.msra.mxu0 0.0
    %126 = vmatprep.subr.mxu0 0.0
    %127 = vmatpush1.msra.mxu0 0.0
    %128 = vmatprep.subr.mxu0 0.0
    %129 = vmatpush1.msra.mxu0 0.0
    %130 = vmatprep.subr.mxu0 0.0
    %131 = vmatpush1.msra.mxu0 0.0
    %132 = vmatprep.subr.mxu0 0.0
    %133 = vmatpush1.msra.mxu0 0.0
    %134 = vmatprep.subr.mxu0 0.0
    %135 = vmatpush1.msra.mxu0 0.0
    %136 = vmatprep.subr.mxu0 0.0
    %137 = vmatpush1.msra.mxu0 0.0
    %138 = vmatprep.subr.mxu0 0.0
    %139 = vmatpush1.msra.mxu0 0.0
    %140 = vmatprep.subr.mxu0 0.0
    %141 = vmatpush1.msra.mxu0 0.0
    %142 = vmatprep.subr.mxu0 0.0
    %143 = vmatpush1.msra.mxu0 0.0
    %144 = vmatprep.mubr.f32.mxu0 0.0
    %145 = vmatmul.mubr.f32.gmra.mrb[0].mxu0 %v69
    %v146 = vpop.f32.mrb[0].mxu0
    %v147 = vadd.f32 0.0, %v146
    %v148 = vpop.f32.mrb[0].mxu0
    %149 = vmatprep.mubr.f32.mxu0 0.0
    %150 = vmatmul.mubr.f32.gmra.mrb[0].mxu0 %v72
    %v151 = vpop.f32.mrb[0].mxu0
    %v152 = vadd.f32 0.0, %v151
    %v153 = vpop.f32.mrb[0].mxu0
    %154 = vmatprep.mubr.f32.mxu0 0.0
    %155 = vmatmul.mubr.f32.gmra.mrb[0].mxu0 %v75
    %v156 = vpop.f32.mrb[0].mxu0
    %v157 = vadd.f32 0.0, %v156
    %v158 = vpop.f32.mrb[0].mxu0
    %159 = vmatprep.mubr.f32.mxu0 0.0
    %160 = vmatmul.mubr.f32.gmra.mrb[0].mxu0 %v78
    %v161 = vpop.f32.mrb[0].mxu0
    %v162 = vadd.f32 0.0, %v161
    %v163 = vpop.f32.mrb[0].mxu0
    %164 = vdwg.mxu0
    %165 = vmatprep.subr.mxu0 %v34
    %166 = vmatpush1.msra.mxu0 %v33
    %167 = vmatprep.subr.mxu0 %v36
    %168 = vmatpush1.msra.mxu0 %v35
    %169 = vmatprep.subr.mxu0 %v38
    %170 = vmatpush1.msra.mxu0 %v37
    %171 = vmatprep.subr.mxu0 %v40
    %172 = vmatpush1.msra.mxu0 %v39
    %173 = vmatprep.subr.mxu0 %v42
    %174 = vmatpush1.msra.mxu0 %v41
    %175 = vmatprep.subr.mxu0 %v44
    %176 = vmatpush1.msra.mxu0 %v43
    %177 = vmatprep.subr.mxu0 %v46
    %178 = vmatpush1.msra.mxu0 %v45
    %179 = vmatprep.subr.mxu0 %v48
    %180 = vmatpush1.msra.mxu0 %v47
    %181 = vmatprep.subr.mxu0 %v50
    %182 = vmatpush1.msra.mxu0 %v49
    %183 = vmatprep.subr.mxu0 %v52
    %184 = vmatpush1.msra.mxu0 %v51
    %185 = vmatprep.subr.mxu0 %v54
    %186 = vmatpush1.msra.mxu0 %v53
    %187 = vmatprep.subr.mxu0 %v56
    %188 = vmatpush1.msra.mxu0 %v55
    %189 = vmatprep.subr.mxu0 %v58
    %190 = vmatpush1.msra.mxu0 %v57
    %191 = vmatprep.subr.mxu0 %v60
    %192 = vmatpush1.msra.mxu0 %v59
    %193 = vmatprep.subr.mxu0 %v62
    %194 = vmatpush1.msra.mxu0 %v61
    %195 = vmatprep.subr.mxu0 %v64
    %196 = vmatpush1.msra.mxu0 %v63
    %197 = vmatprep.subr.mxu0 0.0
    %198 = vmatpush1.msra.mxu0 0.0
    %199 = vmatprep.subr.mxu0 0.0
    %200 = vmatpush1.msra.mxu0 0.0
    %201 = vmatprep.subr.mxu0 0.0
    %202 = vmatpush1.msra.mxu0 0.0
    %203 = vmatprep.subr.mxu0 0.0
    %204 = vmatpush1.msra.mxu0 0.0
    %205 = vmatprep.subr.mxu0 0.0
    %206 = vmatpush1.msra.mxu0 0.0
    %207 = vmatprep.subr.mxu0 0.0
    %208 = vmatpush1.msra.mxu0 0.0
    %209 = vmatprep.subr.mxu0 0.0
    %210 = vmatpush1.msra.mxu0 0.0
    %211 = vmatprep.subr.mxu0 0.0
    %212 = vmatpush1.msra.mxu0 0.0
    %213 = vmatprep.subr.mxu0 0.0
    %214 = vmatpush1.msra.mxu0 0.0
    %215 = vmatprep.subr.mxu0 0.0
    %216 = vmatpush1.msra.mxu0 0.0
    %217 = vmatprep.subr.mxu0 0.0
    %218 = vmatpush1.msra.mxu0 0.0
    %219 = vmatprep.subr.mxu0 0.0
    %220 = vmatpush1.msra.mxu0 0.0
    %221 = vmatprep.subr.mxu0 0.0
    %222 = vmatpush1.msra.mxu0 0.0
    %223 = vmatprep.subr.mxu0 0.0
    %224 = vmatpush1.msra.mxu0 0.0
    %225 = vmatprep.subr.mxu0 0.0
    %226 = vmatpush1.msra.mxu0 0.0
    %227 = vmatprep.subr.mxu0 0.0
    %228 = vmatpush1.msra.mxu0 0.0
    %229 = vmatprep.mubr.f32.mxu0 0.0
    %230 = vmatmul.mubr.f32.gmra.mrb[0].mxu0 %v147
    %v231 = vpop.f32.mrb[0].mxu0
    %v232 = vadd.f32 0.0, %v231
    %v233 = vpop.f32.mrb[0].mxu0
    %v234 = vadd.f32 0.0, %v233
    %235 = vmatprep.mubr.f32.mxu0 0.0
    %236 = vmatmul.mubr.f32.gmra.mrb[0].mxu0 %v152
    %v237 = vpop.f32.mrb[0].mxu0
    %v238 = vadd.f32 0.0, %v237
    %v239 = vpop.f32.mrb[0].mxu0
    %v240 = vadd.f32 0.0, %v239
    %241 = vmatprep.mubr.f32.mxu0 0.0
    %242 = vmatmul.mubr.f32.gmra.mrb[0].mxu0 %v157
    %v243 = vpop.f32.mrb[0].mxu0
    %v244 = vadd.f32 0.0, %v243
    %v245 = vpop.f32.mrb[0].mxu0
    %v246 = vadd.f32 0.0, %v245
    %247 = vmatprep.mubr.f32.mxu0 0.0
    %248 = vmatmul.mubr.f32.gmra.mrb[0].mxu0 %v162
    %v249 = vpop.f32.mrb[0].mxu0
    %v250 = vadd.f32 0.0, %v249
    %v251 = vpop.f32.mrb[0].mxu0
    %v252 = vadd.f32 0.0, %v251
    %253 = vdwg.mxu0
    %254 = vst [vmem:[#allocation5] sm:$0xff] %v232
    %255 = vst [vmem:[#allocation5 + $0x8] sm:$0xff] %v234
    %256 = vst [vmem:[#allocation5 + $0x10] sm:$0xff] %v238
    %257 = vst [vmem:[#allocation5 + $0x18] sm:$0xff] %v240
    %258 = vst [vmem:[#allocation5 + $0x20] sm:$0xff] %v244
    %259 = vst [vmem:[#allocation5 + $0x28] sm:$0xff] %v246
    %260 = vst [vmem:[#allocation5 + $0x30] sm:$0xff] %v250
    %261 = vst [vmem:[#allocation5 + $0x38] sm:$0xff] %v252
    // Predicated region
    $region18: #{tpu_custom_call.1} parent=1 // pred_check
      _
    $region19: #{tpu_custom_call.1} parent=1 // pred_check_branch
      %263 = sbr.rel (0) target = $region21
    $region20: #{tpu_custom_call.1} parent=1 // pred_region
      %s265 = ssub.s32 1024, 1024
      %266 = vsyncadd [#allocation4], %s265
      %s267 = sshll.u32 [#allocation5], 4
      %s268 = int_to_ptr.vmem [resolvable:$true] %s267
      %273 = dma.vmem_to_hbm [thread:$0]  %s268, 1024, %s3, [#allocation4], 256, 256, 16
    $region21: #{tpu_custom_call.1} parent=1 // pred_fallthru
      _
    // Predicated region
    $region22: #{tpu_custom_call.1} parent=1 // pred_check
      _
    $region23: #{tpu_custom_call.1} parent=1 // pred_check_branch
      %275 = sbr.rel (0) target = $region25
    $region24: #{tpu_custom_call.1} parent=1 // pred_region
      %276 = dma.done [#allocation4], 1024
    $region25: #{tpu_custom_call.1} parent=1 // pred_fallthru
      _
    %277 = vsyncpa [#allocation3], 1
    %278 = vsyncpa [#allocation4], 1

</llo_original>
